<compile_context>
chip_gen: v7x
topology: tpu7x:2x2x1
jax: 0.10.0
libtpu: 0.0.40
codegen_flags: <defaults>
</compile_context>

<pallas_src>
import functools

import jax
import jax.numpy as jnp
from jax.experimental import pallas as pl
from jax.experimental.pallas import tpu as pltpu

_LANE = 128      # lane width
_MAX_TM = 2048   # max row-block height (1 MiB f32 per input per buffer)


def _num_tensorcores():
    """2 TensorCores per chip on v7x; 1 on v5e/v6e.  Conservative default: 1."""
    try:
        kind = jax.devices()[0].device_kind.lower()
    except Exception:
        return 1
    return 2 if ("v7" in kind or "tpu7" in kind) else 1


def _neg_sample_loss_kernel(*refs, rows, tm, n_inner, needs_valid,
                            keep_threshold, inv_keep, seed, has_mask):
    if has_mask:
        x_ref, y_ref, m_ref, num_ref, den_ref = refs
    else:
        x_ref, y_ref, num_ref = refs
        m_ref = None
        den_ref = None

    c = pl.program_id(0)
    i = pl.program_id(1)
    blk = c * n_inner + i          # logical (un-clamped) row-block id

    @pl.when(i == 0)
    def _init():
        num_ref[...] = jnp.zeros_like(num_ref)
        if has_mask:
            den_ref[...] = jnp.zeros_like(den_ref)

    x = x_ref[...].astype(jnp.float32)
    y = y_ref[...].astype(jnp.float32)

    # PyTorch BCELoss clamps each log term at -100 (so 0*log(0) contributes 0).
    bce = -(y * jnp.maximum(jnp.log(x), -100.0)
            + (1.0 - y) * jnp.maximum(jnp.log(1.0 - x), -100.0))

    if keep_threshold is not None:
        # Dropout on the negative part only: weight = y (dropped) or
        # y + (1-y)/keep_prob (kept).  Randomness: counter-based hash of the
        # flat element index — works under Mosaic and interpret mode alike.
        base = (blk * (tm * _LANE)).astype(jnp.uint32)
        idx = (base
               + jax.lax.broadcasted_iota(jnp.uint32, (tm, _LANE), 0) * jnp.uint32(_LANE)
               + jax.lax.broadcasted_iota(jnp.uint32, (tm, _LANE), 1))
        h = idx ^ jnp.uint32(seed & 0xFFFFFFFF)
        h = (h ^ (h >> 16)) * jnp.uint32(0x7FEB352D)
        h = (h ^ (h >> 15)) * jnp.uint32(0x846CA68B)
        h = h ^ (h >> 16)
        keep = h < jnp.uint32(keep_threshold)
        w = jnp.where(keep, y + (1.0 - y) * inv_keep, y)
        contrib = bce * w
    else:
        contrib = bce              # eval mode / p==0: dropout is identity

    if needs_valid:
        # Only the ragged last row block and clamped duplicate blocks need this;
        # statically skipped for fully aligned single-core grids.
        row_ids = blk * tm + jax.lax.broadcasted_iota(jnp.int32, (tm, _LANE), 0)
        valid = row_ids < rows
        contrib = jnp.where(valid, contrib, 0.0)

    def _fold(t):
        # Fold a (tm, 128) tile into an (8, 128) block with pure vreg-wise adds.
        if tm > 8:
            return t.reshape(tm // 8, 8, _LANE).sum(axis=0)
        return t

    if has_mask:
        m = m_ref[...].astype(jnp.float32)
        if needs_valid:
            m = jnp.where(valid, m, 0.0)
        num_ref[0] = num_ref[0] + _fold(contrib * m)
        den_ref[0] = den_ref[0] + _fold(m)
    else:
        num_ref[0] = num_ref[0] + _fold(contrib)


def _tail_terms(x, y, m, keep_prob, training, seed):
    """Plain-JAX BCE(+dropout) for the <128-element ragged tail."""
    xf = x.astype(jnp.float32)
    yf = y.astype(jnp.float32)
    bce = -(yf * jnp.maximum(jnp.log(xf), -100.0)
            + (1.0 - yf) * jnp.maximum(jnp.log(1.0 - xf), -100.0))
    if training and keep_prob < 1.0:
        key = jax.random.fold_in(jax.random.PRNGKey(seed), 0x7A11)
        keep = jax.random.bernoulli(key, keep_prob, xf.shape).astype(jnp.float32)
        w = yf + (1.0 - yf) * keep / keep_prob
        contrib = bce * w
    else:
        contrib = bce
    if m is not None:
        mf = m.astype(jnp.float32)
        return jnp.sum(contrib * mf), jnp.sum(mf)
    return jnp.sum(contrib), jnp.float32(xf.size)


def negative_sample_loss(logits, labels, mask=None, *, p=0.4, training=True, seed=0):
    assert logits.shape == labels.shape
    has_mask = mask is not None
    if has_mask:
        assert mask.shape == logits.shape

    n = int(logits.size)
    rows = n // _LANE
    tail = n - rows * _LANE

    flat_x = jnp.ravel(logits)
    flat_y = jnp.ravel(labels)
    flat_m = jnp.ravel(mask) if has_mask else None

    keep_prob = 1.0 - float(p)
    do_dropout = bool(training) and float(p) > 0.0
    keep_threshold = None
    inv_keep = 1.0
    if do_dropout:
        keep_threshold = min(int(round(keep_prob * float(1 << 32))), (1 << 32) - 1)
        inv_keep = 1.0 / max(keep_prob, 1e-30)

    num_total = jnp.float32(0.0)
    den_total = jnp.float32(0.0)

    if rows > 0:
        n_main = rows * _LANE

        def to_slab(f):
            # Pure reshape when numel is 128-aligned; otherwise a prefix slice.
            # TODO(synk): for guaranteed zero-copy on unaligned sizes, switch to
            # memory_space=pl.ANY + manual DMA with an exact-sized final transfer.
            sl = f if tail == 0 else f[:n_main]
            return sl.reshape(rows, _LANE)

        slabs = [to_slab(flat_x), to_slab(flat_y)]
        if has_mask:
            slabs.append(to_slab(flat_m))

        # Row-block height: multiple of 8 (so tiles fold onto an (8,128) block),
        # never larger than the slab, capped at _MAX_TM.
        tm = rows if rows < 8 else min(_MAX_TM, (rows // 8) * 8)
        acc_rows = 8 if tm >= 8 else tm

        total_blocks = pl.cdiv(rows, tm)
        ncores = max(1, min(_num_tensorcores(), total_blocks))
        n_inner = pl.cdiv(total_blocks, ncores)
        needs_valid = (rows % tm != 0) or (ncores * n_inner != total_blocks)

        def in_map(c, i):
            # Clamp so DMAs stay in-bounds; duplicate blocks contribute 0 via the
            # in-kernel validity mask (computed from the un-clamped block id).
            return (jnp.minimum(c * n_inner + i, total_blocks - 1), 0)

        in_spec = pl.BlockSpec((tm, _LANE), in_map)
        acc_shape = jax.ShapeDtypeStruct((ncores, acc_rows, _LANE), jnp.float32)
        acc_spec = pl.BlockSpec((1, acc_rows, _LANE), lambda c, i: (c, 0, 0))

        kernel = functools.partial(
            _neg_sample_loss_kernel,
            rows=rows,
            tm=tm,
            n_inner=n_inner,
            needs_valid=needs_valid,
            keep_threshold=keep_threshold,
            inv_keep=inv_keep,
            seed=int(seed),
            has_mask=has_mask,
        )

        if has_mask:
            out_shape = (acc_shape, acc_shape)
            out_specs = (acc_spec, acc_spec)
        else:
            out_shape = acc_shape
            out_specs = acc_spec

        # TODO(synk): on v7x, verify in xprof that the 'parallel' axis actually
        # engages both TensorCores; if not, switch it to pltpu.CORE_PARALLEL.
        result = pl.pallas_call(
            kernel,
            out_shape=out_shape,
            grid=(ncores, n_inner),
            in_specs=[in_spec] * len(slabs),
            out_specs=out_specs,
            compiler_params=pltpu.CompilerParams(
                dimension_semantics=("parallel", "arbitrary")),
        )(*slabs)

        if has_mask:
            num_parts, den_parts = result
            num_total = num_total + jnp.sum(num_parts)
            den_total = den_total + jnp.sum(den_parts)
        else:
            num_total = num_total + jnp.sum(result)

    if tail > 0:
        tx = flat_x[rows * _LANE:]
        ty = flat_y[rows * _LANE:]
        tmk = flat_m[rows * _LANE:] if has_mask else None
        t_num, t_den = _tail_terms(tx, ty, tmk, keep_prob, do_dropout, int(seed))
        num_total = num_total + t_num
        if has_mask:
            den_total = den_total + t_den

    if has_mask:
        return num_total / den_total
    return num_total / jnp.float32(n)


def _reference(logits, labels, mask=None):
    """Pure-jnp transcription of the PyTorch forward in eval mode (dropout = id)."""
    x = logits.astype(jnp.float32)
    y = labels.astype(jnp.float32)
    bce = -(y * jnp.maximum(jnp.log(x), -100.0)
            + (1.0 - y) * jnp.maximum(jnp.log(1.0 - x), -100.0))
    loss = bce * y + bce * (1.0 - y)
    if mask is not None:
        m = mask.astype(jnp.float32)
        return jnp.sum(loss * m) / jnp.sum(m)
    return jnp.mean(loss)


if __name__ == "__main__":
    # Small shape consistent with the module: batch=2, seq=8, labels=32.
    B, S, L = 2, 8, 32
    k1, k2, k3 = jax.random.split(jax.random.PRNGKey(0), 3)
    logits = jax.random.uniform(k1, (B, S, L), jnp.float32, 1e-4, 1.0 - 1e-4)   # probs
    labels = jax.random.bernoulli(k2, 0.2, (B, S, L)).astype(jnp.float32)        # 0/1 targets
    mask = jax.random.bernoulli(k3, 0.8, (B, S, L)).astype(jnp.float32)          # 0/1 mask

    # Deterministic (eval-mode: dropout = identity) paths validated exactly.
    out_m = jax.block_until_ready(
        negative_sample_loss(logits, labels, mask, p=0.4, training=False))
    ref_m = _reference(logits, labels, mask)
    assert jnp.allclose(out_m, ref_m, rtol=1e-5, atol=1e-5), (out_m, ref_m)

    out_nm = jax.block_until_ready(
        negative_sample_loss(logits, labels, None, p=0.4, training=False))
    ref_nm = _reference(logits, labels, None)
    assert jnp.allclose(out_nm, ref_nm, rtol=1e-5, atol=1e-5), (out_nm, ref_nm)

    # Medium shape: exercises multi-block grid, ragged last row block and the
    # <128-element tail path (26000 elements, not 128-aligned).
    kb1, kb2, kb3 = jax.random.split(jax.random.PRNGKey(1), 3)
    big = (4, 65, 100)
    blogits = jax.random.uniform(kb1, big, jnp.float32, 1e-4, 1.0 - 1e-4)
    blabels = jax.random.bernoulli(kb2, 0.2, big).astype(jnp.float32)
    bmask = jax.random.bernoulli(kb3, 0.8, big).astype(jnp.float32)
    out_b = jax.block_until_ready(
        negative_sample_loss(blogits, blabels, bmask, p=0.4, training=False))
    ref_b = _reference(blogits, blabels, bmask)
    assert jnp.allclose(out_b, ref_b, rtol=1e-4, atol=1e-5), (out_b, ref_b)

    # Training mode exercises the in-kernel counter-hash dropout.
    # TODO(synk): torch.nn.Dropout's host RNG stream cannot be bit-matched; checked for sanity only.
    out_tr = jax.block_until_ready(
        negative_sample_loss(logits, labels, mask, p=0.4, training=True, seed=1234))
    assert bool(jnp.isfinite(out_tr)), out_tr

    print("KERNEL_OK")
</pallas_src>

<mosaic_0001>
module attributes {stable_mosaic.version = 11 : i64} {
  func.func @_neg_sample_loss_kernel(%arg0: i32, %arg1: i32, %arg2: memref<4x128xf32, #tpu.memory_space<vmem>>, %arg3: memref<4x128xf32, #tpu.memory_space<vmem>>, %arg4: memref<4x128xf32, #tpu.memory_space<vmem>>, %arg5: memref<1x4x128xf32, #tpu.memory_space<vmem>>, %arg6: memref<1x4x128xf32, #tpu.memory_space<vmem>>) attributes {dimension_semantics = [#tpu.dimension_semantics<parallel>, #tpu.dimension_semantics<arbitrary>], iteration_bounds = array<i64: 1, 1>, scalar_prefetch = 0 : i64, scratch_operands = 0 : i64, tpu.core_type = #tpu.core_type<tc>, window_params = [{transform_indices = @transform_0, window_bounds = array<i64: 4, 128>}, {transform_indices = @transform_1, window_bounds = array<i64: 4, 128>}, {transform_indices = @transform_2, window_bounds = array<i64: 4, 128>}, {transform_indices = @transform_3, window_bounds = array<i64: 1, 4, 128>}, {transform_indices = @transform_4, window_bounds = array<i64: 1, 4, 128>}]} {
    %c0_i32 = arith.constant 0 : i32
    %0 = arith.cmpi eq, %arg1, %c0_i32 : i32
    %1 = arith.extui %0 : i1 to i32
    %c0_i32_0 = arith.constant 0 : i32
    %2 = arith.cmpi ne, %1, %c0_i32_0 : i32
    scf.if %2 {
      %cst_22 = arith.constant 0.000000e+00 : f32
      %34 = vector.broadcast %cst_22 : f32 to vector<1x4x128xf32>
      %c0_23 = arith.constant 0 : index
      %c0_24 = arith.constant 0 : index
      %c0_25 = arith.constant 0 : index
      %35 = vector.load %arg5[%c0_23, %c0_24, %c0_25] : memref<1x4x128xf32, #tpu.memory_space<vmem>>, vector<1x4x128xf32>
      tpu.vector_store %arg5[%c0_23, %c0_24, %c0_25], %34 {strides = array<i32>} : memref<1x4x128xf32, #tpu.memory_space<vmem>>, vector<1x4x128xf32>,
      %cst_26 = arith.constant 0.000000e+00 : f32
      %36 = vector.broadcast %cst_26 : f32 to vector<1x4x128xf32>
      %c0_27 = arith.constant 0 : index
      %c0_28 = arith.constant 0 : index
      %c0_29 = arith.constant 0 : index
      %37 = vector.load %arg6[%c0_27, %c0_28, %c0_29] : memref<1x4x128xf32, #tpu.memory_space<vmem>>, vector<1x4x128xf32>
      tpu.vector_store %arg6[%c0_27, %c0_28, %c0_29], %36 {strides = array<i32>} : memref<1x4x128xf32, #tpu.memory_space<vmem>>, vector<1x4x128xf32>,
    } else {
    }
    %c0 = arith.constant 0 : index
    %c0_1 = arith.constant 0 : index
    %3 = vector.load %arg2[%c0, %c0_1] : memref<4x128xf32, #tpu.memory_space<vmem>>, vector<4x128xf32>
    %c0_2 = arith.constant 0 : index
    %c0_3 = arith.constant 0 : index
    %4 = vector.load %arg3[%c0_2, %c0_3] : memref<4x128xf32, #tpu.memory_space<vmem>>, vector<4x128xf32>
    %5 = math.log %3 : vector<4x128xf32>
    %cst = arith.constant -1.000000e+02 : f32
    %6 = vector.broadcast %cst : f32 to vector<4x128xf32>
    %7 = arith.maximumf %5, %6 : vector<4x128xf32>
    %8 = arith.mulf %4, %7 : vector<4x128xf32>
    %cst_4 = arith.constant 1.000000e+00 : f32
    %9 = vector.broadcast %cst_4 : f32 to vector<4x128xf32>
    %10 = arith.subf %9, %4 : vector<4x128xf32>
    %cst_5 = arith.constant 1.000000e+00 : f32
    %11 = vector.broadcast %cst_5 : f32 to vector<4x128xf32>
    %12 = arith.subf %11, %3 : vector<4x128xf32>
    %13 = math.log %12 : vector<4x128xf32>
    %cst_6 = arith.constant -1.000000e+02 : f32
    %14 = vector.broadcast %cst_6 : f32 to vector<4x128xf32>
    %15 = arith.maximumf %13, %14 : vector<4x128xf32>
    %16 = arith.mulf %10, %15 : vector<4x128xf32>
    %17 = arith.addf %8, %16 : vector<4x128xf32>
    %cst_7 = arith.constant 0.000000e+00 : f32
    %18 = vector.broadcast %cst_7 : f32 to vector<4x128xf32>
    %19 = arith.subf %18, %17 : vector<4x128xf32>
    %c0_8 = arith.constant 0 : index
    %c0_9 = arith.constant 0 : index
    %20 = vector.load %arg4[%c0_8, %c0_9] : memref<4x128xf32, #tpu.memory_space<vmem>>, vector<4x128xf32>
    %c0_10 = arith.constant 0 : index
    %c0_11 = arith.constant 0 : index
    %c0_12 = arith.constant 0 : index
    %21 = vector.load %arg5[%c0_10, %c0_11, %c0_12] : memref<1x4x128xf32, #tpu.memory_space<vmem>>, vector<1x4x128xf32>
    %22 = vector.shape_cast %21 : vector<1x4x128xf32> to vector<4x128xf32>
    %23 = arith.mulf %19, %20 : vector<4x128xf32>
    %24 = arith.addf %22, %23 : vector<4x128xf32>
    %c0_13 = arith.constant 0 : index
    %c0_14 = arith.constant 0 : index
    %c0_15 = arith.constant 0 : index
    %25 = vector.load %arg5[%c0_13, %c0_14, %c0_15] : memref<1x4x128xf32, #tpu.memory_space<vmem>>, vector<1x4x128xf32>
    %26 = vector.shape_cast %25 : vector<1x4x128xf32> to vector<4x128xf32>
    %27 = vector.shape_cast %24 : vector<4x128xf32> to vector<1x4x128xf32>
    tpu.vector_store %arg5[%c0_13, %c0_14, %c0_15], %27 {strides = array<i32>} : memref<1x4x128xf32, #tpu.memory_space<vmem>>, vector<1x4x128xf32>,
    %c0_16 = arith.constant 0 : index
    %c0_17 = arith.constant 0 : index
    %c0_18 = arith.constant 0 : index
    %28 = vector.load %arg6[%c0_16, %c0_17, %c0_18] : memref<1x4x128xf32, #tpu.memory_space<vmem>>, vector<1x4x128xf32>
    %29 = vector.shape_cast %28 : vector<1x4x128xf32> to vector<4x128xf32>
    %30 = arith.addf %29, %20 : vector<4x128xf32>
    %c0_19 = arith.constant 0 : index
    %c0_20 = arith.constant 0 : index
    %c0_21 = arith.constant 0 : index
    %31 = vector.load %arg6[%c0_19, %c0_20, %c0_21] : memref<1x4x128xf32, #tpu.memory_space<vmem>>, vector<1x4x128xf32>
    %32 = vector.shape_cast %31 : vector<1x4x128xf32> to vector<4x128xf32>
    %33 = vector.shape_cast %30 : vector<4x128xf32> to vector<1x4x128xf32>
    tpu.vector_store %arg6[%c0_19, %c0_20, %c0_21], %33 {strides = array<i32>} : memref<1x4x128xf32, #tpu.memory_space<vmem>>, vector<1x4x128xf32>,
    return
  }
  func.func @transform_0(%arg0: i32, %arg1: i32) -> (i32, i32) {
    %c1_i32 = arith.constant 1 : i32
    %0 = arith.muli %arg0, %c1_i32 : i32
    %1 = arith.addi %0, %arg1 : i32
    %c0_i32 = arith.constant 0 : i32
    %2 = arith.minsi %1, %c0_i32 : i32
    %c0_i32_0 = arith.constant 0 : i32
    %c0_i32_1 = arith.constant 0 : i32
    return %2, %c0_i32_0 : i32, i32
  }
  func.func @transform_1(%arg0: i32, %arg1: i32) -> (i32, i32) {
    %c1_i32 = arith.constant 1 : i32
    %0 = arith.muli %arg0, %c1_i32 : i32
    %1 = arith.addi %0, %arg1 : i32
    %c0_i32 = arith.constant 0 : i32
    %2 = arith.minsi %1, %c0_i32 : i32
    %c0_i32_0 = arith.constant 0 : i32
    %c0_i32_1 = arith.constant 0 : i32
    return %2, %c0_i32_0 : i32, i32
  }
  func.func @transform_2(%arg0: i32, %arg1: i32) -> (i32, i32) {
    %c1_i32 = arith.constant 1 : i32
    %0 = arith.muli %arg0, %c1_i32 : i32
    %1 = arith.addi %0, %arg1 : i32
    %c0_i32 = arith.constant 0 : i32
    %2 = arith.minsi %1, %c0_i32 : i32
    %c0_i32_0 = arith.constant 0 : i32
    %c0_i32_1 = arith.constant 0 : i32
    return %2, %c0_i32_0 : i32, i32
  }
  func.func @transform_3(%arg0: i32, %arg1: i32) -> (i32, i32, i32) {
    %c0_i32 = arith.constant 0 : i32
    %c0_i32_0 = arith.constant 0 : i32
    %c0_i32_1 = arith.constant 0 : i32
    return %arg0, %c0_i32, %c0_i32_0 : i32, i32, i32
  }
  func.func @transform_4(%arg0: i32, %arg1: i32) -> (i32, i32, i32) {
    %c0_i32 = arith.constant 0 : i32
    %c0_i32_0 = arith.constant 0 : i32
    %c0_i32_1 = arith.constant 0 : i32
    return %arg0, %c0_i32, %c0_i32_0 : i32, i32, i32
  }
}

</mosaic_0001>

<llo_original>
// kernel: tpu_custom_call.1
$region0: #{tpu_custom_call.1}
  #allocation0 [shape = 'u32[]', space=smem, size = 0x4, offset = 0x4, fixed_abs, tag = 'smem constant byte address 0x4 - core index']
  #allocation1 [shape = 'u32[144,128]{1,0:T(1,128)}', space=vmem, size = 0x12000, scoped, tag = 'internal scratch']
  %s0 = inlined_call_operand.hbm [shape: f32[4,128], index: 0, kind: input, shape index: {}]
  %s1 = inlined_call_operand.hbm [shape: f32[4,128], index: 1, kind: input, shape index: {}]
  %s2 = inlined_call_operand.vmem [shape: f32[4,128], index: 2, kind: input, shape index: {}]
  %s3 = inlined_call_operand.hbm [shape: f32[1,4,128], index: 3, kind: output, shape index: {0}]
  %s4 = inlined_call_operand.hbm [shape: f32[1,4,128], index: 4, kind: output, shape index: {1}]
  %5 = xla_tuple %s3, %s4
  %s6 = sld [smem:[#allocation0]]
  $region42: #{tpu_custom_call.1} parent=0
    _
  %s8 = ssub.s32 1, %s6
  %s9 = scalar_select 0, %s8, %s6
  $region1: #{tpu_custom_call.1} parent=0
    #allocation2 [shape = 'u8[2048]{0}', space=vmem, size = 0x800, scoped, tag = 'input window, operand 0, single buffered']
    #allocation3 [shape = 's32[1]{0}', space=sflag, size = 0x4, scoped, tag = 'scoped memory for tpu_custom_call.1']
    #allocation4 [shape = 's32[1]{0}', space=sflag, size = 0x4, scoped, tag = 'scoped memory for tpu_custom_call.1']
    #allocation5 [shape = 'u8[2048]{0}', space=vmem, size = 0x800, scoped, tag = 'input window, operand 1, single buffered']
    #allocation6 [shape = 's32[1]{0}', space=sflag, size = 0x4, scoped, tag = 'scoped memory for tpu_custom_call.1']
    #allocation7 [shape = 'u8[2048]{0}', space=vmem, size = 0x800, scoped, tag = 'output window, operand 0, single buffered']
    #allocation8 [shape = 'u8[2048]{0}', space=vmem, size = 0x800, scoped, tag = 'output window, operand 1, single buffered']
    #allocation9 [shape = 's32[1]{0}', space=sflag, size = 0x4, scoped, tag = 'scoped memory for tpu_custom_call.1']
    %10 = vsyncpa [#allocation3], 0
    %11 = vsyncpa [#allocation6], 0
    %12 = vsyncpa [#allocation4], 0
    %13 = vsyncpa [#allocation9], 0
    // Predicated region
    $region2: #{tpu_custom_call.1} parent=1 // pred_check
      _
    $region3: #{tpu_custom_call.1} parent=1 // pred_check_branch
      %15 = sbr.rel (0) target = $region5
    $region4: #{tpu_custom_call.1} parent=1 // pred_region
      %s16 = sadd.s32 0, 0
      %p17 = scmp.lt.s32.totalorder %s16, 0
      %s18 = scalar_select %p17, %s16, 0
      %s20 = ssub.s32 64, 64
      %21 = vsyncadd [#allocation3], %s20
      %s22 = smul.addr %s18, 64
      %s23 = scalar_lea.hbm %s0, %s22
      %s25 = sshll.u32 [#allocation2], 4
      %s26 = int_to_ptr.vmem [resolvable:$true] %s25
      %28 = dma.hbm_to_vmem [thread:$0]  %s23, 64, %s26, [#allocation3]
    $region5: #{tpu_custom_call.1} parent=1 // pred_fallthru
      _
    // Predicated region
    $region6: #{tpu_custom_call.1} parent=1 // pred_check
      _
    $region7: #{tpu_custom_call.1} parent=1 // pred_check_branch
      %30 = sbr.rel (0) target = $region9
    $region8: #{tpu_custom_call.1} parent=1 // pred_region
      %s31 = sadd.s32 0, 0
      %p32 = scmp.lt.s32.totalorder %s31, 0
      %s33 = scalar_select %p32, %s31, 0
      %s35 = ssub.s32 64, 64
      %36 = vsyncadd [#allocation6], %s35
      %s37 = smul.addr %s33, 64
      %s38 = scalar_lea.hbm %s1, %s37
      %s40 = sshll.u32 [#allocation5], 4
      %s41 = int_to_ptr.vmem [resolvable:$true] %s40
      %43 = dma.hbm_to_vmem [thread:$0]  %s38, 64, %s41, [#allocation6]
    $region9: #{tpu_custom_call.1} parent=1 // pred_fallthru
      _
    // Predicated region
    $region10: #{tpu_custom_call.1} parent=1 // pred_check
      _
    $region11: #{tpu_custom_call.1} parent=1 // pred_check_branch
      %45 = sbr.rel (0) target = $region13
    $region12: #{tpu_custom_call.1} parent=1 // pred_region
      %s46 = sadd.s32 0, 0
      %p47 = scmp.lt.s32.totalorder %s46, 0
      %s48 = scalar_select %p47, %s46, 0
      %p49 = scmp.lt.s32.totalorder %s48, 0
      %s50 = scalar_select %p49, %s48, 0
      %s51 = smul.addr %s50, 4
      %s52 = scalar_lea.vmem %s2, %s51
      %s53 = sadd.s32 0, 0
      %p54 = scmp.lt.s32.totalorder %s53, 0
      %s55 = scalar_select %p54, %s53, 0
    $region13: #{tpu_custom_call.1} parent=1 // pred_fallthru
      _
    // Predicated region
    $region14: #{tpu_custom_call.1} parent=1 // pred_check
      _
    $region15: #{tpu_custom_call.1} parent=1 // pred_check_branch
      %57 = sbr.rel (0) target = $region17
    $region16: #{tpu_custom_call.1} parent=1 // pred_region
      %58 = dma.done [#allocation3], 64
    $region17: #{tpu_custom_call.1} parent=1 // pred_fallthru
      _
    // Predicated region
    $region18: #{tpu_custom_call.1} parent=1 // pred_check
      _
    $region19: #{tpu_custom_call.1} parent=1 // pred_check_branch
      %60 = sbr.rel (0) target = $region21
    $region20: #{tpu_custom_call.1} parent=1 // pred_region
      %61 = dma.done [#allocation6], 64
    $region21: #{tpu_custom_call.1} parent=1 // pred_fallthru
      _
    %s62 = sadd.s32 0, 0
    %p63 = scmp.lt.s32.totalorder %s62, 0
    %s64 = scalar_select %p63, %s62, 0
    %p65 = scmp.lt.s32.totalorder %s64, 0
    %s66 = scalar_select %p65, %s64, 0
    %s67 = smul.addr %s66, 4
    %s68 = scalar_lea.vmem %s2, %s67
    %s69 = sadd.s32 0, 0
    %p70 = scmp.lt.s32.totalorder %s69, 0
    %s71 = scalar_select %p70, %s69, 0
    %s72 = sadd.s32 0, 0
    %p73 = scmp.lt.s32.totalorder %s72, 0
    %s74 = scalar_select %p73, %s72, 0
    %s75 = sadd.s32 0, 0
    %p76 = scmp.lt.s32.totalorder %s75, 0
    %s77 = scalar_select %p76, %s75, 0
    %p78 = scmp.lt.s32.totalorder %s77, 0
    %s79 = scalar_select %p78, %s77, 0
    %s80 = smul.addr %s79, 4
    %s81 = scalar_lea.vmem %s2, %s80
    %s82 = sadd.s32 0, 0
    %p83 = scmp.lt.s32.totalorder %s82, 0
    %s84 = scalar_select %p83, %s82, 0
    %p85 = scmp.eq.s32.totalorder 0, 0
    // Predicated region
    $region22: #{tpu_custom_call.1} parent=1 // pred_check
      %p86 = pneg %p85
    $region23: #{tpu_custom_call.1} parent=1 // pred_check_branch
      %88 = sbr.rel (%p86) target = $region25
    $region24: #{tpu_custom_call.1} parent=1 // pred_region
      %89 = vst [vmem:[#allocation7] sm:$0xf] 0.0
      %90 = vst [vmem:[#allocation8] sm:$0xf] 0.0
    $region25: #{tpu_custom_call.1} parent=1 // pred_fallthru
      _
    %v91 = vld [vmem:[#allocation2] sm:$0xf]
    %v92 = vld [vmem:[#allocation5] sm:$0xf]
    %v93 = vlog2.pop %v91
    %v94 = vmul.f32 %v93, 0.6931472
    %v95 = vmax.f32 %v94, -100.0
    %v96 = vmul.f32 %v92, %v95
    %v97 = vsub.f32 1.0, %v92
    %v98 = vsub.f32 1.0, %v91
    %v99 = vlog2.pop %v98
    %v100 = vmul.f32 %v99, 0.6931472
    %v101 = vmax.f32 %v100, -100.0
    %v102 = vmul.f32 %v97, %v101
    %v103 = vadd.f32 %v96, %v102
    %v104 = vsub.f32 0.0, %v103
    %v105 = vld [vmem:[%s81] sm:$0xf]
    %v106 = vld [vmem:[#allocation7] sm:$0xf]
    %v107 = vmul.f32 %v104, %v105
    %v108 = vadd.f32 %v106, %v107
    %109 = vst [vmem:[#allocation7] sm:$0xf] %v108
    %v110 = vld [vmem:[#allocation8] sm:$0xf]
    %v111 = vadd.f32 %v110, %v105
    %112 = vst [vmem:[#allocation8] sm:$0xf] %v111
    // Predicated region
    $region26: #{tpu_custom_call.1} parent=1 // pred_check
      _
    $region27: #{tpu_custom_call.1} parent=1 // pred_check_branch
      %114 = sbr.rel (0) target = $region29
    $region28: #{tpu_custom_call.1} parent=1 // pred_region
      %s116 = ssub.s32 64, 64
      %117 = vsyncadd [#allocation4], %s116
      %s119 = sshll.u32 [#allocation7], 4
      %s120 = int_to_ptr.vmem [resolvable:$true] %s119
      %122 = dma.vmem_to_hbm [thread:$0]  %s120, 64, %s3, [#allocation4]
    $region29: #{tpu_custom_call.1} parent=1 // pred_fallthru
      _
    // Predicated region
    $region30: #{tpu_custom_call.1} parent=1 // pred_check
      _
    $region31: #{tpu_custom_call.1} parent=1 // pred_check_branch
      %124 = sbr.rel (0) target = $region33
    $region32: #{tpu_custom_call.1} parent=1 // pred_region
      %s126 = ssub.s32 64, 64
      %127 = vsyncadd [#allocation9], %s126
      %s129 = sshll.u32 [#allocation8], 4
      %s130 = int_to_ptr.vmem [resolvable:$true] %s129
      %132 = dma.vmem_to_hbm [thread:$0]  %s130, 64, %s4, [#allocation9]
    $region33: #{tpu_custom_call.1} parent=1 // pred_fallthru
      _
    // Predicated region
    $region34: #{tpu_custom_call.1} parent=1 // pred_check
      _
    $region35: #{tpu_custom_call.1} parent=1 // pred_check_branch
      %134 = sbr.rel (0) target = $region37
    $region36: #{tpu_custom_call.1} parent=1 // pred_region
      %135 = dma.done [#allocation4], 64
    $region37: #{tpu_custom_call.1} parent=1 // pred_fallthru
      _
    // Predicated region
    $region38: #{tpu_custom_call.1} parent=1 // pred_check
      _
    $region39: #{tpu_custom_call.1} parent=1 // pred_check_branch
      %137 = sbr.rel (0) target = $region41
    $region40: #{tpu_custom_call.1} parent=1 // pred_region
      %138 = dma.done [#allocation9], 64
    $region41: #{tpu_custom_call.1} parent=1 // pred_fallthru
      _
    %139 = vsyncpa [#allocation3], 1
    %140 = vsyncpa [#allocation6], 1
    %141 = vsyncpa [#allocation4], 1
    %142 = vsyncpa [#allocation9], 1

</llo_original>
